<compile_context>
chip_gen: v6e
topology: v6e:2x2x1
jax: 0.10.0
libtpu: 0.0.40
codegen_flags: <defaults>
</compile_context>

<pallas_src>
import functools

import jax
import jax.numpy as jnp
from jax import lax
from jax.experimental import pallas as pl
from jax.experimental.pallas import tpu as pltpu


def _round_up(x, m):
    return (x + m - 1) // m * m


def _cdiv(a, b):
    return (a + b - 1) // b


# --------------------------------------------------------------------------- kernels
def _conv_stats_kernel(w_ref, p_ref, conv_ref, stats_ref, sum_ref, sq_ref):
    """One (core, tile) step: (C_out, K) @ (K, tile_m) matmul + per-channel sum/sumsq.

    w_ref:     (C_out, K)       bf16 reshaped conv weights (resident across the grid)
    p_ref:     (K, tile_m)      bf16 im2col patch columns for this tile
    conv_ref:  (C_out, tile_m)  bf16 conv output tile (lane-dense)
    stats_ref: (C_out, 2)       f32 per-core partial [sum | sumsq], written once
    sum_ref:   (C_out, 1)       f32 VMEM accumulator, lives across the tile axis
    sq_ref:    (C_out, 1)       f32 VMEM accumulator
    """
    t = pl.program_id(1)

    @pl.when(t == 0)
    def _():
        sum_ref[...] = jnp.zeros_like(sum_ref)
        sq_ref[...] = jnp.zeros_like(sq_ref)

    conv = jnp.dot(w_ref[...], p_ref[...], preferred_element_type=jnp.float32)
    conv_ref[...] = conv.astype(conv_ref.dtype)

    # padded columns are all-zero -> contribute nothing to the statistics
    sum_ref[...] += jnp.sum(conv, axis=1, keepdims=True)
    sq_ref[...] += jnp.sum(conv * conv, axis=1, keepdims=True)

    @pl.when(t == pl.num_programs(1) - 1)
    def _():
        stats_ref[:, 0:1] = sum_ref[...]
        stats_ref[:, 1:2] = sq_ref[...]


def _bn_relu_kernel(conv_ref, stats_ref, gamma_ref, beta_ref, o_ref, *, count, eps):
    """One tile: y = relu((conv - mean) * rsqrt(var + eps) * gamma + beta).

    conv_ref:  (C_out, tile_m)  bf16 conv tile
    stats_ref: (C_out, 2)       f32 global [sum | sumsq]
    gamma_ref: (C_out, 1), beta_ref: (C_out, 1)
    o_ref:     (C_out, tile_m)  output tile
    """
    inv_count = 1.0 / count
    mean = stats_ref[:, 0:1] * inv_count
    var = stats_ref[:, 1:2] * inv_count - mean * mean   # biased variance (train mode)
    var = jnp.maximum(var, 0.0)                         # guard f32 cancellation
    inv_std = lax.rsqrt(var + eps)
    scale = gamma_ref[...] * inv_std                    # (C_out, 1)
    shift = beta_ref[...] - mean * scale                # (C_out, 1)
    y = conv_ref[...].astype(jnp.float32) * scale + shift
    o_ref[...] = jnp.maximum(y, 0.0).astype(o_ref.dtype)


# --------------------------------------------------------------------------- wrapper
def conv_bn_relu(x_nchw, weight, gamma, beta, *,
                 stride=1, padding=1, dilation=1, eps=1e-5, tile_m=2048):
    """x_nchw: (N, C_in, H, W); weight: (C_out, C_in, KH, KW) as in PyTorch."""
    N, C_in, H, W = x_nchw.shape
    C_out, _, KH, KW = weight.shape

    H_out = (H + 2 * padding - dilation * (KH - 1) - 1) // stride + 1
    W_out = (W + 2 * padding - dilation * (KW - 1) - 1) // stride + 1
    M = N * H_out * W_out
    Kd = KH * KW * C_in

    # ---- im2col, channels-major (layout plumbing only; no K / C_out zero padding) --
    # patches_T rows ordered (kh, kw, c_in); columns ordered (n, h_out, w_out)
    x_cnhw = jnp.transpose(x_nchw, (1, 0, 2, 3))            # (C_in, N, H, W)
    x_pad = jnp.pad(x_cnhw, ((0, 0), (0, 0),
                             (padding, padding), (padding, padding)))
    taps = []
    for kh in range(KH):
        for kw in range(KW):
            h0, w0 = kh * dilation, kw * dilation
            sl = lax.slice(
                x_pad,
                (0, 0, h0, w0),
                (C_in, N,
                 h0 + (H_out - 1) * stride + 1,
                 w0 + (W_out - 1) * stride + 1),
                (1, 1, stride, stride))                     # (C_in, N, H_out, W_out)
            taps.append(sl.reshape(C_in, M))
    patches_t = jnp.concatenate(taps, axis=0).astype(jnp.bfloat16)   # (Kd, M)

    # (C_out, C_in, KH, KW) -> (C_out, KH, KW, C_in) -> (C_out, Kd); same row ordering
    w2d_t = jnp.transpose(weight, (0, 2, 3, 1)).reshape(C_out, Kd).astype(jnp.bfloat16)
    gamma_c = gamma.astype(jnp.float32).reshape(C_out, 1)
    beta_c = beta.astype(jnp.float32).reshape(C_out, 1)

    # ---- tiling: lane dim = M (spatial), tile_m a multiple of 128 ------------------
    tile_m = max(128, min(_round_up(tile_m, 128), _round_up(M, 128)))
    total_tiles = _cdiv(M, tile_m)
    num_cores = 2 if total_tiles >= 2 else 1     # v7x has 2 TCs; harmless on v5e/v6e
    tiles_per_core = _cdiv(total_tiles, num_cores)
    M_pad = num_cores * tiles_per_core * tile_m

    patches_t = jnp.pad(patches_t, ((0, 0), (0, M_pad - M)))

    # ---- pass 1: conv-as-matmul (bf16 in / f32 acc) + per-core partial sum/sumsq ---
    conv_t, stats_partials = pl.pallas_call(
        _conv_stats_kernel,
        out_shape=(jax.ShapeDtypeStruct((C_out, M_pad), jnp.bfloat16),
                   jax.ShapeDtypeStruct((num_cores, C_out, 2), jnp.float32)),
        grid_spec=pltpu.PrefetchScalarGridSpec(
            num_scalar_prefetch=0,
            grid=(num_cores, tiles_per_core),
            in_specs=[
                pl.BlockSpec((C_out, Kd), lambda c, t: (0, 0)),
                pl.BlockSpec((Kd, tile_m),
                             lambda c, t: (0, c * tiles_per_core + t)),
            ],
            out_specs=(
                pl.BlockSpec((C_out, tile_m),
                             lambda c, t: (0, c * tiles_per_core + t)),
                pl.BlockSpec((None, C_out, 2), lambda c, t: (c, 0, 0)),
            ),
            scratch_shapes=[pltpu.VMEM((C_out, 1), jnp.float32),
                            pltpu.VMEM((C_out, 1), jnp.float32)],
        ),
        compiler_params=pltpu.CompilerParams(
            dimension_semantics=("parallel", "arbitrary")),
    )(w2d_t, patches_t)

    # combine per-core partial statistics (tiny: (num_cores, C_out, 2))
    stats = jnp.sum(stats_partials, axis=0)                  # (C_out, 2)

    # ---- pass 2: tiled BN-normalize + ReLU (fully parallel over tiles) -------------
    kernel2 = functools.partial(_bn_relu_kernel, count=float(M), eps=float(eps))
    y_t = pl.pallas_call(
        kernel2,
        out_shape=jax.ShapeDtypeStruct((C_out, M_pad), x_nchw.dtype),
        grid_spec=pltpu.PrefetchScalarGridSpec(
            num_scalar_prefetch=0,
            grid=(M_pad // tile_m,),
            in_specs=[
                pl.BlockSpec((C_out, tile_m), lambda i: (0, i)),
                pl.BlockSpec((C_out, 2), lambda i: (0, 0)),
                pl.BlockSpec((C_out, 1), lambda i: (0, 0)),
                pl.BlockSpec((C_out, 1), lambda i: (0, 0)),
            ],
            out_specs=pl.BlockSpec((C_out, tile_m), lambda i: (0, i)),
        ),
        compiler_params=pltpu.CompilerParams(
            dimension_semantics=("parallel",)),
    )(conv_t, stats, gamma_c, beta_c)

    # strip lane padding; back to NCHW to match the PyTorch module's convention
    y = y_t[:, :M].reshape(C_out, N, H_out, W_out)
    return jnp.transpose(y, (1, 0, 2, 3))


# --------------------------------------------------------------------------- reference
def _reference(x_nchw, weight, gamma, beta, *, stride, padding, dilation, eps):
    conv = lax.conv_general_dilated(
        x_nchw, weight,
        window_strides=(stride, stride),
        padding=((padding, padding), (padding, padding)),
        rhs_dilation=(dilation, dilation),
        dimension_numbers=("NCHW", "OIHW", "NCHW"))
    mean = jnp.mean(conv, axis=(0, 2, 3), keepdims=True)
    var = jnp.mean((conv - mean) ** 2, axis=(0, 2, 3), keepdims=True)
    y = (conv - mean) * lax.rsqrt(var + eps)
    y = y * gamma.reshape(1, -1, 1, 1) + beta.reshape(1, -1, 1, 1)
    return jnp.maximum(y, 0.0)


if __name__ == "__main__":
    # ConvBNReLU(c_in=4, c_out=8, kernel_size=3, stride=1, padding=1, dilation=1)
    c_in, c_out, ksize, stride, padding, dilation = 4, 8, 3, 1, 1, 1
    N, H, W = 2, 16, 16

    key = jax.random.PRNGKey(0)
    kx, kw, kg, kb = jax.random.split(key, 4)

    x = jax.random.normal(kx, (N, c_in, H, W), dtype=jnp.float32)
    weight = jax.random.normal(kw, (c_out, c_in, ksize, ksize), dtype=jnp.float32) * 0.1
    gamma = 1.0 + 0.1 * jax.random.normal(kg, (c_out,), dtype=jnp.float32)
    beta = 0.1 * jax.random.normal(kb, (c_out,), dtype=jnp.float32)

    out = conv_bn_relu(x, weight, gamma, beta,
                       stride=stride, padding=padding, dilation=dilation)
    out = jax.block_until_ready(out)

    ref = _reference(x, weight, gamma, beta,
                     stride=stride, padding=padding, dilation=dilation, eps=1e-5)
    assert out.shape == (N, c_out, H, W)
    # tolerance reflects bf16 MXU operands (f32 accumulation); f32 reference
    assert jnp.allclose(out, ref, atol=2e-2, rtol=2e-2), "mismatch vs reference"

    print("KERNEL_OK")
</pallas_src>

<mosaic_0001>
module attributes {stable_mosaic.version = 11 : i64} {
  func.func @_conv_stats_kernel(%arg0: i32, %arg1: i32, %arg2: memref<8x36xbf16, #tpu.memory_space<vmem>>, %arg3: memref<36x512xbf16, #tpu.memory_space<vmem>>, %arg4: memref<8x512xbf16, #tpu.memory_space<vmem>>, %arg5: memref<1x8x2xf32, #tpu.memory_space<vmem>>, %arg6: memref<8x1xf32, #tpu.memory_space<vmem>>, %arg7: memref<8x1xf32, #tpu.memory_space<vmem>>) attributes {dimension_semantics = [#tpu.dimension_semantics<parallel>, #tpu.dimension_semantics<arbitrary>], iteration_bounds = array<i64: 1, 1>, scalar_prefetch = 0 : i64, scratch_operands = 2 : i64, tpu.core_type = #tpu.core_type<tc>, window_params = [{pipeline_mode = #tpu.pipeline_mode<synchronous>, transform_indices = @transform_0, window_bounds = array<i64: 8, 36>}, {transform_indices = @transform_1, window_bounds = array<i64: 36, 512>}, {transform_indices = @transform_2, window_bounds = array<i64: 8, 512>}, {transform_indices = @transform_3, window_bounds = array<i64: 1, 8, 2>}]} {
    %c0_i32 = arith.constant 0 : i32
    %0 = arith.cmpi eq, %arg1, %c0_i32 : i32
    %1 = arith.extui %0 : i1 to i32
    %c0_i32_0 = arith.constant 0 : i32
    %2 = arith.cmpi ne, %1, %c0_i32_0 : i32
    scf.if %2 {
      %cst_18 = arith.constant 0.000000e+00 : f32
      %22 = vector.broadcast %cst_18 : f32 to vector<8x1xf32>
      %c0_19 = arith.constant 0 : index
      %c0_20 = arith.constant 0 : index
      %23 = vector.load %arg6[%c0_19, %c0_20] : memref<8x1xf32, #tpu.memory_space<vmem>>, vector<8x1xf32>
      tpu.vector_store %arg6[%c0_19, %c0_20], %22 {strides = array<i32>} : memref<8x1xf32, #tpu.memory_space<vmem>>, vector<8x1xf32>,
      %cst_21 = arith.constant 0.000000e+00 : f32
      %24 = vector.broadcast %cst_21 : f32 to vector<8x1xf32>
      %c0_22 = arith.constant 0 : index
      %c0_23 = arith.constant 0 : index
      %25 = vector.load %arg7[%c0_22, %c0_23] : memref<8x1xf32, #tpu.memory_space<vmem>>, vector<8x1xf32>
      tpu.vector_store %arg7[%c0_22, %c0_23], %24 {strides = array<i32>} : memref<8x1xf32, #tpu.memory_space<vmem>>, vector<8x1xf32>,
    } else {
    }
    %c0 = arith.constant 0 : index
    %c0_1 = arith.constant 0 : index
    %3 = vector.load %arg2[%c0, %c0_1] : memref<8x36xbf16, #tpu.memory_space<vmem>>, vector<8x36xbf16>
    %c0_2 = arith.constant 0 : index
    %c0_3 = arith.constant 0 : index
    %4 = vector.load %arg3[%c0_2, %c0_3] : memref<36x512xbf16, #tpu.memory_space<vmem>>, vector<36x512xbf16>
    %cst = arith.constant dense<0.000000e+00> : vector<8x512xf32>
    %5 = tpu.matmul %3, %4, %cst {dimension_numbers = #tpu.dot_dimension_numbers<[1], [0], [0], [1], [0, 0, 1, 1], [], []>} : vector<8x36xbf16>, vector<36x512xbf16>, vector<8x512xf32> -> vector<8x512xf32>
    %6 = arith.truncf %5 : vector<8x512xf32> to vector<8x512xbf16>
    %c0_4 = arith.constant 0 : index
    %c0_5 = arith.constant 0 : index
    %7 = vector.load %arg4[%c0_4, %c0_5] : memref<8x512xbf16, #tpu.memory_space<vmem>>, vector<8x512xbf16>
    tpu.vector_store %arg4[%c0_4, %c0_5], %6 {strides = array<i32>} : memref<8x512xbf16, #tpu.memory_space<vmem>>, vector<8x512xbf16>,
    %c0_6 = arith.constant 0 : index
    %c0_7 = arith.constant 0 : index
    %8 = vector.load %arg6[%c0_6, %c0_7] : memref<8x1xf32, #tpu.memory_space<vmem>>, vector<8x1xf32>
    %cst_8 = arith.constant dense<0.000000e+00> : vector<8xf32>
    %9 = vector.multi_reduction <add>, %5, %cst_8 [1] : vector<8x512xf32> to vector<8xf32>
    %10 = vector.shape_cast %9 : vector<8xf32> to vector<8x1xf32>
    %11 = arith.addf %8, %10 : vector<8x1xf32>
    %c0_9 = arith.constant 0 : index
    %c0_10 = arith.constant 0 : index
    %12 = vector.load %arg6[%c0_9, %c0_10] : memref<8x1xf32, #tpu.memory_space<vmem>>, vector<8x1xf32>
    tpu.vector_store %arg6[%c0_9, %c0_10], %11 {strides = array<i32>} : memref<8x1xf32, #tpu.memory_space<vmem>>, vector<8x1xf32>,
    %c0_11 = arith.constant 0 : index
    %c0_12 = arith.constant 0 : index
    %13 = vector.load %arg7[%c0_11, %c0_12] : memref<8x1xf32, #tpu.memory_space<vmem>>, vector<8x1xf32>
    %14 = arith.mulf %5, %5 : vector<8x512xf32>
    %cst_13 = arith.constant dense<0.000000e+00> : vector<8xf32>
    %15 = vector.multi_reduction <add>, %14, %cst_13 [1] : vector<8x512xf32> to vector<8xf32>
    %16 = vector.shape_cast %15 : vector<8xf32> to vector<8x1xf32>
    %17 = arith.addf %13, %16 : vector<8x1xf32>
    %c0_14 = arith.constant 0 : index
    %c0_15 = arith.constant 0 : index
    %18 = vector.load %arg7[%c0_14, %c0_15] : memref<8x1xf32, #tpu.memory_space<vmem>>, vector<8x1xf32>
    tpu.vector_store %arg7[%c0_14, %c0_15], %17 {strides = array<i32>} : memref<8x1xf32, #tpu.memory_space<vmem>>, vector<8x1xf32>,
    %c0_i32_16 = arith.constant 0 : i32
    %19 = arith.cmpi eq, %arg1, %c0_i32_16 : i32
    %20 = arith.extui %19 : i1 to i32
    %c0_i32_17 = arith.constant 0 : i32
    %21 = arith.cmpi ne, %20, %c0_i32_17 : i32
    scf.if %21 {
      %c0_18 = arith.constant 0 : index
      %c0_19 = arith.constant 0 : index
      %22 = vector.load %arg6[%c0_18, %c0_19] : memref<8x1xf32, #tpu.memory_space<vmem>>, vector<8x1xf32>
      %c0_20 = arith.constant 0 : index
      %c0_21 = arith.constant 0 : index
      %c0_22 = arith.constant 0 : index
      %23 = vector.load %arg5[%c0_20, %c0_21, %c0_22] : memref<1x8x2xf32, #tpu.memory_space<vmem>>, vector<1x8x1xf32>
      %24 = vector.shape_cast %23 : vector<1x8x1xf32> to vector<8x1xf32>
      %25 = vector.shape_cast %22 : vector<8x1xf32> to vector<1x8x1xf32>
      tpu.vector_store %arg5[%c0_20, %c0_21, %c0_22], %25 {strides = array<i32>} : memref<1x8x2xf32, #tpu.memory_space<vmem>>, vector<1x8x1xf32>,
      %c0_23 = arith.constant 0 : index
      %c0_24 = arith.constant 0 : index
      %26 = vector.load %arg7[%c0_23, %c0_24] : memref<8x1xf32, #tpu.memory_space<vmem>>, vector<8x1xf32>
      %c0_25 = arith.constant 0 : index
      %c0_26 = arith.constant 0 : index
      %c1 = arith.constant 1 : index
      %27 = vector.load %arg5[%c0_25, %c0_26, %c1] : memref<1x8x2xf32, #tpu.memory_space<vmem>>, vector<1x8x1xf32>
      %28 = vector.shape_cast %27 : vector<1x8x1xf32> to vector<8x1xf32>
      %29 = vector.shape_cast %26 : vector<8x1xf32> to vector<1x8x1xf32>
      tpu.vector_store %arg5[%c0_25, %c0_26, %c1], %29 {strides = array<i32>} : memref<1x8x2xf32, #tpu.memory_space<vmem>>, vector<1x8x1xf32>,
    } else {
    }
    return
  }
  func.func @transform_0(%arg0: i32, %arg1: i32) -> (i32, i32) {
    %c0_i32 = arith.constant 0 : i32
    %c0_i32_0 = arith.constant 0 : i32
    %c0_i32_1 = arith.constant 0 : i32
    return %c0_i32, %c0_i32_0 : i32, i32
  }
  func.func @transform_1(%arg0: i32, %arg1: i32) -> (i32, i32) {
    %c1_i32 = arith.constant 1 : i32
    %0 = arith.muli %arg0, %c1_i32 : i32
    %1 = arith.addi %0, %arg1 : i32
    %c0_i32 = arith.constant 0 : i32
    %c0_i32_0 = arith.constant 0 : i32
    return %c0_i32, %1 : i32, i32
  }
  func.func @transform_2(%arg0: i32, %arg1: i32) -> (i32, i32) {
    %c1_i32 = arith.constant 1 : i32
    %0 = arith.muli %arg0, %c1_i32 : i32
    %1 = arith.addi %0, %arg1 : i32
    %c0_i32 = arith.constant 0 : i32
    %c0_i32_0 = arith.constant 0 : i32
    return %c0_i32, %1 : i32, i32
  }
  func.func @transform_3(%arg0: i32, %arg1: i32) -> (i32, i32, i32) {
    %c0_i32 = arith.constant 0 : i32
    %c0_i32_0 = arith.constant 0 : i32
    %c0_i32_1 = arith.constant 0 : i32
    return %arg0, %c0_i32, %c0_i32_0 : i32, i32, i32
  }
}

</mosaic_0001>

<llo_original>
// kernel: tpu_custom_call.1
$region0: #{tpu_custom_call.1}
  #allocation0 [shape = 'u32[]', space=smem, size = 0x4, offset = 0x4, fixed_abs, tag = 'smem constant byte address 0x4 - core index']
  #allocation1 [shape = 'u32[144,128]{1,0:T(1,128)}', space=vmem, size = 0x12000, scoped, tag = 'internal scratch']
  #allocation2 [shape = 'f32[8,1]{1,0:T(8,128)}', space=vmem, size = 0x1000, scoped, tag = 'scratch operand']
  #allocation3 [shape = 'f32[8,1]{1,0:T(8,128)}', space=vmem, size = 0x1000, scoped, tag = 'scratch operand']
  %s0 = inlined_call_operand.hbm [shape: bf16[8,36], index: 0, kind: input, shape index: {}]
  %s1 = inlined_call_operand.hbm [shape: bf16[36,512], index: 1, kind: input, shape index: {}]
  %s2 = inlined_call_operand.hbm [shape: bf16[8,512], index: 2, kind: output, shape index: {0}]
  %s3 = inlined_call_operand.vmem [shape: f32[1,8,2], index: 3, kind: output, shape index: {1}]
  %4 = xla_tuple %s2, %s3
  %s5 = sld [smem:[#allocation0]]
  $region42: #{tpu_custom_call.1} parent=0
    _
  %s7 = ssub.s32 1, %s5
  %s8 = scalar_select 0, %s7, %s5
  $region1: #{tpu_custom_call.1} parent=0
    #allocation4 [shape = 'u8[2048]{0}', space=vmem, size = 0x800, scoped, tag = 'input window, operand 0, single buffered']
    #allocation5 [shape = 's32[1]{0}', space=sflag, size = 0x4, scoped, tag = 'scoped memory for tpu_custom_call.1']
    #allocation6 [shape = 's32[1]{0}', space=sflag, size = 0x4, scoped, tag = 'scoped memory for tpu_custom_call.1']
    #allocation7 [shape = 'u8[40960]{0}', space=vmem, size = 0xa000, scoped, tag = 'input window, operand 1, single buffered']
    #allocation8 [shape = 's32[1]{0}', space=sflag, size = 0x4, scoped, tag = 'scoped memory for tpu_custom_call.1']
    #allocation9 [shape = 'u8[8192]{0}', space=vmem, size = 0x2000, scoped, tag = 'output window, operand 0, single buffered']
    %9 = vsyncpa [#allocation5], 0
    %10 = vsyncpa [#allocation8], 0
    %11 = vsyncpa [#allocation6], 0
    // Predicated region
    $region2: #{tpu_custom_call.1} parent=1 // pred_check
      _
    $region3: #{tpu_custom_call.1} parent=1 // pred_check_branch
      %13 = sbr.rel (0) target = $region5
    $region4: #{tpu_custom_call.1} parent=1 // pred_region
      %s15 = ssub.s32 64, 64
      %16 = vsyncadd [#allocation5], %s15
      %s18 = sshll.u32 [#allocation4], 4
      %s19 = int_to_ptr.vmem [resolvable:$true] %s18
      %21 = dma.hbm_to_vmem [thread:$0]  %s0, 64, %s19, [#allocation5]
    $region5: #{tpu_custom_call.1} parent=1 // pred_fallthru
      _
    // Predicated region
    $region6: #{tpu_custom_call.1} parent=1 // pred_check
      _
    $region7: #{tpu_custom_call.1} parent=1 // pred_check_branch
      %23 = sbr.rel (0) target = $region9
    $region8: #{tpu_custom_call.1} parent=1 // pred_region
      %s24 = sadd.s32 0, 0
      %s25 = smul.u32 4, %s24
      %s27 = ssub.s32 1280, 1280
      %28 = vsyncadd [#allocation8], %s27
      %s29 = smul.addr %s25, 64
      %s30 = scalar_lea.hbm %s1, %s29
      %s31 = sshll.u32 [#allocation7], 4
      %s32 = int_to_ptr.vmem [resolvable:$true] %s31
      %37 = dma.hbm_to_vmem [thread:$0]  %s30, 1280, %s32, [#allocation8], 256, 256, 16
    $region9: #{tpu_custom_call.1} parent=1 // pred_fallthru
      _
    // Predicated region
    $region10: #{tpu_custom_call.1} parent=1 // pred_check
      _
    $region11: #{tpu_custom_call.1} parent=1 // pred_check_branch
      %39 = sbr.rel (0) target = $region13
    $region12: #{tpu_custom_call.1} parent=1 // pred_region
      %40 = dma.done [#allocation5], 64
    $region13: #{tpu_custom_call.1} parent=1 // pred_fallthru
      _
    // Predicated region
    $region14: #{tpu_custom_call.1} parent=1 // pred_check
      _
    $region15: #{tpu_custom_call.1} parent=1 // pred_check_branch
      %42 = sbr.rel (0) target = $region17
    $region16: #{tpu_custom_call.1} parent=1 // pred_region
      %43 = dma.done [#allocation8], 1280
    $region17: #{tpu_custom_call.1} parent=1 // pred_fallthru
      _
    %s44 = sadd.s32 0, 0
    %s45 = smul.u32 4, %s44
    %s46 = sadd.s32 0, 0
    %s47 = smul.u32 4, %s46
    %p49 = scmp.eq.s32.totalorder 0, 0
    // Predicated region
    $region18: #{tpu_custom_call.1} parent=1 // pred_check
      %p50 = pneg %p49
    $region19: #{tpu_custom_call.1} parent=1 // pred_check_branch
      %52 = sbr.rel (%p50) target = $region21
    $region20: #{tpu_custom_call.1} parent=1 // pred_region
      %vm53 = vcmask 7168
      %54 = vst.msk [vmem:[#allocation2] sm:$0xff] %vm53, 0.0
      %55 = vst.msk [vmem:[#allocation3] sm:$0xff] %vm53, 0.0
    $region21: #{tpu_custom_call.1} parent=1 // pred_fallthru
      _
    %v56 = vld [vmem:[#allocation4] sm:$0xf]
    %v57 = vld [vmem:[#allocation7] sm:$0xff]
    %v58 = vld [vmem:[#allocation7 + $0x8] sm:$0xff]
    %v59 = vld [vmem:[#allocation7 + $0x10] sm:$0xff]
    %v60 = vld [vmem:[#allocation7 + $0x18] sm:$0xff]
    %v61 = vld [vmem:[#allocation7 + $0x20] sm:$0xff]
    %v62 = vld [vmem:[#allocation7 + $0x28] sm:$0xff]
    %v63 = vld [vmem:[#allocation7 + $0x30] sm:$0xff]
    %v64 = vld [vmem:[#allocation7 + $0x38] sm:$0xff]
    %v65 = vld [vmem:[#allocation7 + $0x40] sm:$0x33]
    %v66 = vld [vmem:[#allocation7 + $0x48] sm:$0x33]
    %v77 = vunpack.c.l.b16 %v57
    %v78 = vunpack.c.h.b16 %v57
    %v79 = vunpack.c.l.b16 %v58
    %v80 = vunpack.c.h.b16 %v58
    %v81 = vunpack.c.l.b16 %v59
    %v82 = vunpack.c.h.b16 %v59
    %v83 = vunpack.c.l.b16 %v60
    %v84 = vunpack.c.h.b16 %v60
    %v85 = vunpack.c.l.b16 %v61
    %v86 = vunpack.c.h.b16 %v61
    %v87 = vunpack.c.l.b16 %v62
    %v88 = vunpack.c.h.b16 %v62
    %v89 = vunpack.c.l.b16 %v63
    %v90 = vunpack.c.h.b16 %v63
    %v91 = vunpack.c.l.b16 %v64
    %v92 = vunpack.c.h.b16 %v64
    %v93 = vunpack.c.l.b16 %v65
    %v94 = vunpack.c.h.b16 %v65
    %v95 = vunpack.c.l.b16 %v66
    %v96 = vunpack.c.h.b16 %v66
    %v97 = vpack.c.b16 %v81, %v77
    %v98 = vpack.c.b16 %v82, %v78
    %v99 = vpack.c.b16 %v83, %v79
    %v100 = vpack.c.b16 %v84, %v80
    %v101 = vpack.c.b16 %v89, %v85
    %v102 = vpack.c.b16 %v90, %v86
    %v103 = vpack.c.b16 %v91, %v87
    %v104 = vpack.c.b16 %v92, %v88
    %v105 = vpack.c.b16 %v93, %v93
    %v106 = vpack.c.b16 %v94, %v94
    %v107 = vpack.c.b16 %v95, %v95
    %v108 = vpack.c.b16 %v96, %v96
    %vm117 = vcmask 293888
    %v119 = vsel %vm117, %v56, 0
    %vm121 = vcmask 1041408
    %v123 = vsel %vm121, %v105, 0
    %v126 = vsel %vm121, %v106, 0
    %v129 = vsel %vm121, %v107, 0
    %v132 = vsel %vm121, %v108, 0
    %134 = vmatprep.subr.bf16.mxu0 0
    %135 = vmatpush1.bf16.msra.mxu0 0
    %136 = vmatprep.subr.bf16.mxu0 0
    %137 = vmatpush1.bf16.msra.mxu0 0
    %138 = vmatprep.subr.bf16.mxu0 0
    %139 = vmatpush1.bf16.msra.mxu0 0
    %140 = vmatprep.subr.bf16.mxu0 0
    %141 = vmatpush1.bf16.msra.mxu0 0
    %142 = vmatprep.subr.bf16.mxu0 0
    %143 = vmatpush1.bf16.msra.mxu0 0
    %144 = vmatprep.subr.bf16.mxu0 %v126
    %145 = vmatpush1.bf16.msra.mxu0 %v123
    %146 = vmatprep.subr.bf16.mxu0 %v102
    %147 = vmatpush1.bf16.msra.mxu0 %v101
    %148 = vmatprep.subr.bf16.mxu0 %v98
    %149 = vmatpush1.bf16.msra.mxu0 %v97
    %150 = vmatprep.subr.bf16.mxu0 0
    %151 = vmatpush2.bf16.msra.mxu0 0
    %152 = vmatprep.subr.bf16.mxu0 0
    %153 = vmatpush2.bf16.msra.mxu0 0
    %154 = vmatprep.subr.bf16.mxu0 0
    %155 = vmatpush2.bf16.msra.mxu0 0
    %156 = vmatprep.subr.bf16.mxu0 0
    %157 = vmatpush2.bf16.msra.mxu0 0
    %158 = vmatprep.subr.bf16.mxu0 0
    %159 = vmatpush2.bf16.msra.mxu0 0
    %160 = vmatprep.subr.bf16.mxu0 0
    %161 = vmatpush2.bf16.msra.mxu0 0
    %162 = vmatprep.subr.bf16.mxu0 0
    %163 = vmatpush2.bf16.msra.mxu0 0
    %164 = vmatprep.subr.bf16.mxu0 0
    %165 = vmatpush2.bf16.msra.mxu0 0
    %166 = vmatprep.mubr.bf16.mxu0 0
    %167 = vmatmul.mubr.bf16.gmra.mxu0 %v119
    %v168 = vpop.f32.mrf.mxu0
    %v169 = vadd.f32 0.0, %v168
    %v170 = vpop.f32.mrf.mxu0
    %v171 = vadd.f32 0.0, %v170
    %v172 = vpop.f32.mrf.mxu0
    %v173 = vpop.f32.mrf.mxu0
    %174 = vdwg.mxu0
    %175 = vmatprep.subr.bf16.mxu0 0
    %176 = vmatpush1.bf16.msra.mxu0 0
    %177 = vmatprep.subr.bf16.mxu0 0
    %178 = vmatpush1.bf16.msra.mxu0 0
    %179 = vmatprep.subr.bf16.mxu0 0
    %180 = vmatpush1.bf16.msra.mxu0 0
    %181 = vmatprep.subr.bf16.mxu0 0
    %182 = vmatpush1.bf16.msra.mxu0 0
    %183 = vmatprep.subr.bf16.mxu0 0
    %184 = vmatpush1.bf16.msra.mxu0 0
    %185 = vmatprep.subr.bf16.mxu0 %v132
    %186 = vmatpush1.bf16.msra.mxu0 %v129
    %187 = vmatprep.subr.bf16.mxu0 %v104
    %188 = vmatpush1.bf16.msra.mxu0 %v103
    %189 = vmatprep.subr.bf16.mxu0 %v100
    %190 = vmatpush1.bf16.msra.mxu0 %v99
    %191 = vmatprep.subr.bf16.mxu0 0
    %192 = vmatpush2.bf16.msra.mxu0 0
    %193 = vmatprep.subr.bf16.mxu0 0
    %194 = vmatpush2.bf16.msra.mxu0 0
    %195 = vmatprep.subr.bf16.mxu0 0
    %196 = vmatpush2.bf16.msra.mxu0 0
    %197 = vmatprep.subr.bf16.mxu0 0
    %198 = vmatpush2.bf16.msra.mxu0 0
    %199 = vmatprep.subr.bf16.mxu0 0
    %200 = vmatpush2.bf16.msra.mxu0 0
    %201 = vmatprep.subr.bf16.mxu0 0
    %202 = vmatpush2.bf16.msra.mxu0 0
    %203 = vmatprep.subr.bf16.mxu0 0
    %204 = vmatpush2.bf16.msra.mxu0 0
    %205 = vmatprep.subr.bf16.mxu0 0
    %206 = vmatpush2.bf16.msra.mxu0 0
    %207 = vmatprep.mubr.bf16.mxu0 0
    %208 = vmatmul.mubr.bf16.gmra.mxu0 %v119
    %v209 = vpop.f32.mrf.mxu0
    %v210 = vadd.f32 0.0, %v209
    %v211 = vpop.f32.mrf.mxu0
    %v212 = vadd.f32 0.0, %v211
    %v213 = vpop.f32.mrf.mxu0
    %v214 = vpop.f32.mrf.mxu0
    %215 = vdwg.mxu0
    %v216 = vpack.c.bf16 %v169, %v169
    %v217 = vpack.c.bf16 %v171, %v171
    %v218 = vpack.c.bf16 %v210, %v210
    %v219 = vpack.c.bf16 %v212, %v212
    %v224 = vunpack.c.l.b16 %v216
    %v225 = vunpack.c.l.b16 %v217
    %v226 = vunpack.c.l.b16 %v218
    %v227 = vunpack.c.l.b16 %v219
    %v228 = vpack.c.b16 %v225, %v224
    %v229 = vpack.c.b16 %v227, %v226
    %232 = vst [vmem:[#allocation9] sm:$0xff] %v228
    %233 = vst [vmem:[#allocation9 + $0x8] sm:$0xff] %v229
    %v234 = vld [vmem:[#allocation2] sm:$0xff]
    %v235 = vadd.f32 %v169, %v171
    %v236 = vadd.f32 %v235, %v210
    %v237 = vadd.f32 %v236, %v212
    %238 = vadd.xlane.f32.xlu0 %v237
    %v239 = vpop.xlane.xlu0 %238
    %v240 = vadd.f32 %v234, %v239
    %vm241 = vcmask 7168
    %242 = vst.msk [vmem:[#allocation2] sm:$0xff] %vm241, %v240
    %v243 = vld [vmem:[#allocation3] sm:$0xff]
    %v244 = vmul.f32 %v169, %v169
    %v245 = vmul.f32 %v171, %v171
    %v246 = vmul.f32 %v210, %v210
    %v247 = vmul.f32 %v212, %v212
    %v248 = vadd.f32 %v244, %v245
    %v249 = vadd.f32 %v248, %v246
    %v250 = vadd.f32 %v249, %v247
    %251 = vadd.xlane.f32.xlu0 %v250
    %v252 = vpop.xlane.xlu0 %251
    %v253 = vadd.f32 %v243, %v252
    %254 = vst.msk [vmem:[#allocation3] sm:$0xff] %vm241, %v253
    // Predicated region
    $region22: #{tpu_custom_call.1} parent=1 // pred_check
      %p255 = pneg %p49
    $region23: #{tpu_custom_call.1} parent=1 // pred_check_branch
      %257 = sbr.rel (%p255) target = $region25
    $region24: #{tpu_custom_call.1} parent=1 // pred_region
      %v258 = vld [vmem:[#allocation2] sm:$0xff]
      %259 = vst.msk [vmem:[%s3] sm:$0xff] %vm241, %v258
      %v260 = vld [vmem:[#allocation3] sm:$0xff]
      %262 = vrot.lane.b32.xlu0 %v260, 1
      %v263 = vpop.permute.xlu0 %262
      %vm265 = vcmask 15368
      %266 = vst.msk [vmem:[%s3] sm:$0xff] %vm265, %v263
    $region25: #{tpu_custom_call.1} parent=1 // pred_fallthru
      _
    // Predicated region
    $region26: #{tpu_custom_call.1} parent=1 // pred_check
      _
    $region27: #{tpu_custom_call.1} parent=1 // pred_check_branch
      %268 = sbr.rel (0) target = $region29
    $region28: #{tpu_custom_call.1} parent=1 // pred_region
      %s269 = sadd.s32 0, 0
      %s270 = smul.u32 4, %s269
      %s272 = ssub.s32 256, 256
      %273 = vsyncadd [#allocation6], %s272
      %s274 = smul.addr %s270, 64
      %s275 = scalar_lea.hbm %s2, %s274
      %s277 = sshll.u32 [#allocation9], 4
      %s278 = int_to_ptr.vmem [resolvable:$true] %s277
      %280 = dma.vmem_to_hbm [thread:$0]  %s278, 256, %s275, [#allocation6]
    $region29: #{tpu_custom_call.1} parent=1 // pred_fallthru
      _
    // Predicated region
    $region30: #{tpu_custom_call.1} parent=1 // pred_check
      _
    $region31: #{tpu_custom_call.1} parent=1 // pred_check_branch
      %282 = sbr.rel (0) target = $region33
    $region32: #{tpu_custom_call.1} parent=1 // pred_region
      _
    $region33: #{tpu_custom_call.1} parent=1 // pred_fallthru
      _
    // Predicated region
    $region34: #{tpu_custom_call.1} parent=1 // pred_check
      _
    $region35: #{tpu_custom_call.1} parent=1 // pred_check_branch
      %284 = sbr.rel (0) target = $region37
    $region36: #{tpu_custom_call.1} parent=1 // pred_region
      %285 = dma.done [#allocation6], 256
    $region37: #{tpu_custom_call.1} parent=1 // pred_fallthru
      _
    // Predicated region
    $region38: #{tpu_custom_call.1} parent=1 // pred_check
      _
    $region39: #{tpu_custom_call.1} parent=1 // pred_check_branch
      %287 = sbr.rel (0) target = $region41
    $region40: #{tpu_custom_call.1} parent=1 // pred_region
      _
    $region41: #{tpu_custom_call.1} parent=1 // pred_fallthru
      _
    %288 = vsyncpa [#allocation5], 1
    %289 = vsyncpa [#allocation8], 1
    %290 = vsyncpa [#allocation6], 1

</llo_original>
